<compile_context>
chip_gen: v7x
topology: tpu7x:2x2x1
jax: 0.10.0
libtpu: 0.0.40
codegen_flags: <defaults>
</compile_context>

<pallas_src>
import functools

import jax
import jax.numpy as jnp
from jax.experimental import pallas as pl
from jax.experimental.pallas import tpu as pltpu


def _conv1d_glu_kernel(x_ref, w_ref, b_ref, lh_ref, rh_ref, o_ref, im2col_ref,
                       *, K, pad, tile_T, C_in, C_out):
    # x_ref      : (1, C_in, tile_T)        original dtype, lane-aligned tile (also the residual)
    # w_ref      : (2*C_out, K*C_in)        bf16, resident across the whole grid
    # b_ref      : (2*C_out, 1)             f32
    # lh_ref     : (1, 1, C_in, max(pad,1)) columns just left of this tile (zeros at t == 0)
    # rh_ref     : (1, 1, C_in, max(pad,1)) columns just right of this tile (zeros at t == nt-1)
    # o_ref      : (1, C_out, tile_T)
    # im2col_ref : (K*C_in, tile_T)         bf16 VMEM scratch (fused-tap RHS)
    x_res = x_ref[0]                                  # (C_in, tile_T)
    x_bf = x_res.astype(jnp.bfloat16)

    # Center tap: exactly the aligned tile.
    im2col_ref[pad * C_in:(pad + 1) * C_in, :] = x_bf

    if K > 1:
        lh = lh_ref[0, 0].astype(jnp.bfloat16)        # (C_in, pad)
        rh = rh_ref[0, 0].astype(jnp.bfloat16)        # (C_in, pad)
        # Shifted taps: window_k[:, j] = x_padded[:, t*tile_T + j + k]  (zero-padded conv).
        for k in range(K):                            # static unroll over kernel taps
            s = k - pad
            if s == 0:
                continue
            if s < 0:   # shift right: bring in columns from the left halo
                win = jnp.concatenate([lh[:, k:], x_bf[:, :tile_T + s]], axis=1)
            else:       # shift left: bring in columns from the right halo
                win = jnp.concatenate([x_bf[:, s:], rh[:, :s]], axis=1)
            im2col_ref[k * C_in:(k + 1) * C_in, :] = win

    # Single bf16 MXU matmul over the fused K*C_in contraction, f32 accumulation.
    acc = jnp.dot(w_ref[...], im2col_ref[...],
                  preferred_element_type=jnp.float32)  # (2*C_out, tile_T)
    acc = acc + b_ref[...]                             # broadcast bias over time

    x1 = acc[:C_out, :]
    x2 = acc[C_out:, :]
    glu = x1 * jax.nn.sigmoid(x2)

    # TODO(synk): training-mode dropout not implemented (eval / inference only).
    o_ref[0] = (x_res.astype(jnp.float32) + glu).astype(o_ref.dtype)


def _pick_tile_t(T, halo_w):
    for cand in (512, 384, 256, 128):
        if T % cand == 0 and cand >= halo_w:
            return cand
    # TODO(synk): ragged / non-divisible T falls back to a single full-T tile.
    return T


def conv1d_glu(x, weight, bias, *, kernel_size, tile_t=None):
    """x: (B, C_in, T); weight: (2*C_out, C_in, K) [PyTorch layout]; bias: (2*C_out,)."""
    B, C_in, T = x.shape
    two_co, c_in_w, K = weight.shape
    assert K == kernel_size and c_in_w == C_in
    assert K % 2 == 1, "ConvNorm(padding=None) requires odd kernel_size"
    C_out = two_co // 2
    assert C_out == C_in, "residual connection requires in_channels == out_channels"
    pad = (K - 1) // 2
    hw = max(pad, 1)                                   # halo width (>=1 keeps block shapes valid)

    if tile_t is None:
        tile_t = _pick_tile_t(T, hw)
    assert T % tile_t == 0 and tile_t >= K
    nt = T // tile_t

    # Weight -> (2*C_out, K*C_in) bf16; row order k*C_in + c matches the im2col scratch.
    w_flat = (jnp.transpose(weight, (0, 2, 1))
              .reshape(two_co, K * C_in)
              .astype(jnp.bfloat16))
    b_2d = bias.reshape(two_co, 1).astype(jnp.float32)

    # Tiny halo tensors (nt, B, C_in, hw): the `pad` columns each tile needs from its
    # left/right neighbour, zeros at the sequence boundaries.  This replaces the full
    # jnp.pad copy of x; extra HBM traffic is ~2*pad/tile_t of x.
    xr = x.reshape(B, C_in, nt, tile_t)
    zero_edge = jnp.zeros((1, B, C_in, hw), dtype=x.dtype)
    lh = jnp.concatenate(
        [zero_edge, jnp.transpose(xr[:, :, :-1, tile_t - hw:], (2, 0, 1, 3))], axis=0)
    rh = jnp.concatenate(
        [jnp.transpose(xr[:, :, 1:, :hw], (2, 0, 1, 3)), zero_edge], axis=0)

    kernel = functools.partial(_conv1d_glu_kernel, K=K, pad=pad, tile_T=tile_t,
                               C_in=C_in, C_out=C_out)

    return pl.pallas_call(
        kernel,
        out_shape=jax.ShapeDtypeStruct((B, C_out, T), x.dtype),
        grid_spec=pltpu.PrefetchScalarGridSpec(
            num_scalar_prefetch=0,
            grid=(B, nt),
            in_specs=[
                pl.BlockSpec((1, C_in, tile_t), lambda b, t: (b, 0, t)),        # x tile
                pl.BlockSpec((two_co, K * C_in), lambda b, t: (0, 0)),          # fused weight
                pl.BlockSpec((two_co, 1), lambda b, t: (0, 0)),                 # bias
                pl.BlockSpec((1, 1, C_in, hw), lambda b, t: (t, b, 0, 0)),      # left halo
                pl.BlockSpec((1, 1, C_in, hw), lambda b, t: (t, b, 0, 0)),      # right halo
            ],
            out_specs=pl.BlockSpec((1, C_out, tile_t), lambda b, t: (b, 0, t)),
            scratch_shapes=[
                pltpu.VMEM((K * C_in, tile_t), jnp.bfloat16),                   # im2col RHS
            ],
        ),
        compiler_params=pltpu.CompilerParams(
            dimension_semantics=("parallel", "parallel"),
            vmem_limit_bytes=48 * 1024 * 1024,   # fits v7x's 64 MiB physical VMEM w/ headroom
        ),
    )(x, w_flat, b_2d, lh, rh)


def conv1d_glu_reference(x, weight, bias, *, kernel_size, matmul_dtype=None):
    """Pure-JAX reference matching PyTorch Conv1dGLU.forward (eval mode).

    If matmul_dtype is given, the conv operands are rounded to it (residual stays exact),
    mirroring the kernel's bf16-operand / f32-accumulate matmul.
    """
    pad = (kernel_size - 1) // 2
    xc, wc = x, weight
    if matmul_dtype is not None:
        xc = xc.astype(matmul_dtype).astype(x.dtype)
        wc = wc.astype(matmul_dtype).astype(weight.dtype)
    out = jax.lax.conv_general_dilated(
        xc, wc,
        window_strides=(1,), padding=[(pad, pad)],
        dimension_numbers=("NCH", "OIH", "NCH"),
        precision=jax.lax.Precision.HIGHEST,
    ) + bias[None, :, None]
    C_out = weight.shape[0] // 2
    x1, x2 = out[:, :C_out, :], out[:, C_out:, :]
    return x + x1 * jax.nn.sigmoid(x2)


if __name__ == "__main__":
    # Small shapes: batch=2, channels=4 (in == out for the residual), time=16, kernel=3.
    B, C, T, K = 2, 4, 16, 3
    dropout = 0.1  # unused at inference

    key = jax.random.PRNGKey(0)
    kx, kw, kb, kx2 = jax.random.split(key, 4)

    x = jax.random.normal(kx, (B, C, T), dtype=jnp.float32)

    # Deterministic PyTorch-style Conv1d init: U(-bound, bound), bound = 1/sqrt(fan_in).
    fan_in = C * K
    bound = 1.0 / (fan_in ** 0.5)
    weight = jax.random.uniform(kw, (2 * C, C, K), minval=-bound, maxval=bound, dtype=jnp.float32)
    bias = jax.random.uniform(kb, (2 * C,), minval=-bound, maxval=bound, dtype=jnp.float32)

    # Single-tile path (T=16 -> one time tile).
    out = jax.block_until_ready(conv1d_glu(x, weight, bias, kernel_size=K))
    assert out.shape == (B, C, T)
    ref_bf = conv1d_glu_reference(x, weight, bias, kernel_size=K, matmul_dtype=jnp.bfloat16)
    ref_f32 = conv1d_glu_reference(x, weight, bias, kernel_size=K)
    assert jnp.allclose(out, ref_bf, atol=1e-4, rtol=1e-4), "mismatch vs bf16-operand reference"
    assert jnp.allclose(out, ref_f32, atol=5e-2, rtol=5e-2), "mismatch vs f32 reference"

    # Multi-tile path: T=256 with tile_t=128 exercises the time-tiled grid + cross-tile halos.
    T2 = 256
    x2 = jax.random.normal(kx2, (B, C, T2), dtype=jnp.float32)
    out2 = jax.block_until_ready(conv1d_glu(x2, weight, bias, kernel_size=K, tile_t=128))
    ref2 = conv1d_glu_reference(x2, weight, bias, kernel_size=K, matmul_dtype=jnp.bfloat16)
    assert out2.shape == (B, C, T2)
    assert jnp.allclose(out2, ref2, atol=1e-4, rtol=1e-4), "mismatch vs reference (tiled)"

    print("KERNEL_OK")
</pallas_src>

<mosaic_0001>
module attributes {stable_mosaic.version = 11 : i64} {
  func.func @_conv1d_glu_kernel(%arg0: i32, %arg1: i32, %arg2: memref<1x4x16xf32, #tpu.memory_space<vmem>>, %arg3: memref<8x12xbf16, #tpu.memory_space<vmem>>, %arg4: memref<8x1xf32, #tpu.memory_space<vmem>>, %arg5: memref<1x1x4x1xf32, #tpu.memory_space<vmem>>, %arg6: memref<1x1x4x1xf32, #tpu.memory_space<vmem>>, %arg7: memref<1x4x16xf32, #tpu.memory_space<vmem>>, %arg8: memref<12x16xbf16, #tpu.memory_space<vmem>>) attributes {dimension_semantics = [#tpu.dimension_semantics<parallel>, #tpu.dimension_semantics<parallel>], iteration_bounds = array<i64: 2, 1>, scalar_prefetch = 0 : i64, scratch_operands = 1 : i64, tpu.core_type = #tpu.core_type<tc>, window_params = [{transform_indices = @transform_0, window_bounds = array<i64: 1, 4, 16>}, {pipeline_mode = #tpu.pipeline_mode<synchronous>, transform_indices = @transform_1, window_bounds = array<i64: 8, 12>}, {pipeline_mode = #tpu.pipeline_mode<synchronous>, transform_indices = @transform_2, window_bounds = array<i64: 8, 1>}, {transform_indices = @transform_3, window_bounds = array<i64: 1, 1, 4, 1>}, {transform_indices = @transform_4, window_bounds = array<i64: 1, 1, 4, 1>}, {transform_indices = @transform_5, window_bounds = array<i64: 1, 4, 16>}]} {
    %c0 = arith.constant 0 : index
    %c0_0 = arith.constant 0 : index
    %c0_1 = arith.constant 0 : index
    %0 = vector.load %arg2[%c0, %c0_0, %c0_1] : memref<1x4x16xf32, #tpu.memory_space<vmem>>, vector<1x4x16xf32>
    %1 = vector.shape_cast %0 : vector<1x4x16xf32> to vector<4x16xf32>
    %2 = arith.truncf %1 : vector<4x16xf32> to vector<4x16xbf16>
    %c4 = arith.constant 4 : index
    %c0_2 = arith.constant 0 : index
    %3 = vector.load %arg8[%c4, %c0_2] : memref<12x16xbf16, #tpu.memory_space<vmem>>, vector<4x16xbf16>
    tpu.vector_store %arg8[%c4, %c0_2], %2 {strides = array<i32>} : memref<12x16xbf16, #tpu.memory_space<vmem>>, vector<4x16xbf16>,
    %c0_3 = arith.constant 0 : index
    %c0_4 = arith.constant 0 : index
    %c0_5 = arith.constant 0 : index
    %c0_6 = arith.constant 0 : index
    %4 = vector.load %arg5[%c0_3, %c0_4, %c0_5, %c0_6] : memref<1x1x4x1xf32, #tpu.memory_space<vmem>>, vector<1x1x4x1xf32>
    %5 = vector.shape_cast %4 : vector<1x1x4x1xf32> to vector<4x1xf32>
    %6 = arith.truncf %5 : vector<4x1xf32> to vector<4x1xbf16>
    %c0_7 = arith.constant 0 : index
    %c0_8 = arith.constant 0 : index
    %c0_9 = arith.constant 0 : index
    %c0_10 = arith.constant 0 : index
    %7 = vector.load %arg6[%c0_7, %c0_8, %c0_9, %c0_10] : memref<1x1x4x1xf32, #tpu.memory_space<vmem>>, vector<1x1x4x1xf32>
    %8 = vector.shape_cast %7 : vector<1x1x4x1xf32> to vector<4x1xf32>
    %9 = arith.truncf %8 : vector<4x1xf32> to vector<4x1xbf16>
    %10 = vector.extract_strided_slice %2 {offsets = [0, 0], sizes = [4, 15], strides = [1, 1]} : vector<4x16xbf16> to vector<4x15xbf16>
    %11 = tpu.concatenate %6, %10 in 1 : vector<4x1xbf16>, vector<4x15xbf16> -> vector<4x16xbf16>
    %c0_11 = arith.constant 0 : index
    %c0_12 = arith.constant 0 : index
    %12 = vector.load %arg8[%c0_11, %c0_12] : memref<12x16xbf16, #tpu.memory_space<vmem>>, vector<4x16xbf16>
    tpu.vector_store %arg8[%c0_11, %c0_12], %11 {strides = array<i32>} : memref<12x16xbf16, #tpu.memory_space<vmem>>, vector<4x16xbf16>,
    %13 = vector.extract_strided_slice %2 {offsets = [0, 1], sizes = [4, 15], strides = [1, 1]} : vector<4x16xbf16> to vector<4x15xbf16>
    %14 = tpu.concatenate %13, %9 in 1 : vector<4x15xbf16>, vector<4x1xbf16> -> vector<4x16xbf16>
    %c8 = arith.constant 8 : index
    %c0_13 = arith.constant 0 : index
    %15 = vector.load %arg8[%c8, %c0_13] : memref<12x16xbf16, #tpu.memory_space<vmem>>, vector<4x16xbf16>
    tpu.vector_store %arg8[%c8, %c0_13], %14 {strides = array<i32>} : memref<12x16xbf16, #tpu.memory_space<vmem>>, vector<4x16xbf16>,
    %c0_14 = arith.constant 0 : index
    %c0_15 = arith.constant 0 : index
    %16 = vector.load %arg3[%c0_14, %c0_15] : memref<8x12xbf16, #tpu.memory_space<vmem>>, vector<8x12xbf16>
    %c0_16 = arith.constant 0 : index
    %c0_17 = arith.constant 0 : index
    %17 = vector.load %arg8[%c0_16, %c0_17] : memref<12x16xbf16, #tpu.memory_space<vmem>>, vector<12x16xbf16>
    %cst = arith.constant dense<0.000000e+00> : vector<8x16xf32>
    %18 = tpu.matmul %16, %17, %cst {dimension_numbers = #tpu.dot_dimension_numbers<[1], [0], [0], [1], [0, 0, 1, 1], [], []>} : vector<8x12xbf16>, vector<12x16xbf16>, vector<8x16xf32> -> vector<8x16xf32>
    %c0_18 = arith.constant 0 : index
    %c0_19 = arith.constant 0 : index
    %19 = vector.load %arg4[%c0_18, %c0_19] : memref<8x1xf32, #tpu.memory_space<vmem>>, vector<8x1xf32>
    %20 = vector.broadcast %19 : vector<8x1xf32> to vector<8x16xf32>
    %21 = arith.addf %18, %20 : vector<8x16xf32>
    %22 = vector.extract_strided_slice %21 {offsets = [0, 0], sizes = [4, 16], strides = [1, 1]} : vector<8x16xf32> to vector<4x16xf32>
    %23 = vector.extract_strided_slice %21 {offsets = [4, 0], sizes = [4, 16], strides = [1, 1]} : vector<8x16xf32> to vector<4x16xf32>
    %24 = arith.negf %23 : vector<4x16xf32>
    %25 = math.exp %24 : vector<4x16xf32>
    %cst_20 = arith.constant 1.000000e+00 : f32
    %26 = vector.broadcast %cst_20 : f32 to vector<4x16xf32>
    %27 = arith.addf %26, %25 : vector<4x16xf32>
    %28 = arith.divf %26, %27 : vector<4x16xf32>
    %29 = arith.mulf %22, %28 : vector<4x16xf32>
    %30 = arith.addf %1, %29 : vector<4x16xf32>
    %c0_21 = arith.constant 0 : index
    %c0_22 = arith.constant 0 : index
    %c0_23 = arith.constant 0 : index
    %31 = vector.load %arg7[%c0_21, %c0_22, %c0_23] : memref<1x4x16xf32, #tpu.memory_space<vmem>>, vector<1x4x16xf32>
    %32 = vector.shape_cast %31 : vector<1x4x16xf32> to vector<4x16xf32>
    %33 = vector.shape_cast %30 : vector<4x16xf32> to vector<1x4x16xf32>
    tpu.vector_store %arg7[%c0_21, %c0_22, %c0_23], %33 {strides = array<i32>} : memref<1x4x16xf32, #tpu.memory_space<vmem>>, vector<1x4x16xf32>,
    return
  }
  func.func @transform_0(%arg0: i32, %arg1: i32) -> (i32, i32, i32) {
    %c0_i32 = arith.constant 0 : i32
    %c0_i32_0 = arith.constant 0 : i32
    return %arg0, %c0_i32, %arg1 : i32, i32, i32
  }
  func.func @transform_1(%arg0: i32, %arg1: i32) -> (i32, i32) {
    %c0_i32 = arith.constant 0 : i32
    %c0_i32_0 = arith.constant 0 : i32
    %c0_i32_1 = arith.constant 0 : i32
    return %c0_i32, %c0_i32_0 : i32, i32
  }
  func.func @transform_2(%arg0: i32, %arg1: i32) -> (i32, i32) {
    %c0_i32 = arith.constant 0 : i32
    %c0_i32_0 = arith.constant 0 : i32
    %c0_i32_1 = arith.constant 0 : i32
    return %c0_i32, %c0_i32_0 : i32, i32
  }
  func.func @transform_3(%arg0: i32, %arg1: i32) -> (i32, i32, i32, i32) {
    %c0_i32 = arith.constant 0 : i32
    %c0_i32_0 = arith.constant 0 : i32
    %c0_i32_1 = arith.constant 0 : i32
    return %arg1, %arg0, %c0_i32, %c0_i32_0 : i32, i32, i32, i32
  }
  func.func @transform_4(%arg0: i32, %arg1: i32) -> (i32, i32, i32, i32) {
    %c0_i32 = arith.constant 0 : i32
    %c0_i32_0 = arith.constant 0 : i32
    %c0_i32_1 = arith.constant 0 : i32
    return %arg1, %arg0, %c0_i32, %c0_i32_0 : i32, i32, i32, i32
  }
  func.func @transform_5(%arg0: i32, %arg1: i32) -> (i32, i32, i32) {
    %c0_i32 = arith.constant 0 : i32
    %c0_i32_0 = arith.constant 0 : i32
    return %arg0, %c0_i32, %arg1 : i32, i32, i32
  }
}

</mosaic_0001>

<llo_original>
// kernel: tpu_custom_call.1
$region0: #{tpu_custom_call.1}
  #allocation0 [shape = 'u32[]', space=smem, size = 0x4, offset = 0x4, fixed_abs, tag = 'smem constant byte address 0x4 - core index']
  #allocation1 [shape = 'u32[144,128]{1,0:T(1,128)}', space=vmem, size = 0x12000, scoped, tag = 'internal scratch']
  #allocation2 [shape = 'bf16[12,16]{1,0:T(8,128)(2,1)}', space=vmem, size = 0x1000, scoped, tag = 'scratch operand']
  %s0 = inlined_call_operand.vmem [shape: f32[2,4,16], index: 0, kind: input, shape index: {}]
  %s1 = inlined_call_operand.vmem [shape: bf16[8,12], index: 1, kind: input, shape index: {}]
  %s2 = inlined_call_operand.vmem [shape: f32[8,1], index: 2, kind: input, shape index: {}]
  %s3 = inlined_call_operand.vmem [shape: f32[1,2,4,1], index: 3, kind: input, shape index: {}]
  %s4 = inlined_call_operand.vmem [shape: f32[1,2,4,1], index: 4, kind: input, shape index: {}]
  %s5 = inlined_call_operand.hbm [shape: f32[2,4,16], index: 5, kind: output, shape index: {}]
  %s6 = sld [smem:[#allocation0]]
  $region53: #{tpu_custom_call.1} parent=0
    _
  %s8 = ssub.s32 1, %s6
  %s9 = scalar_select 0, %s8, %s6
  $region1: #{tpu_custom_call.1} parent=0
    #allocation3 [shape = 'u8[4096]{0}', space=vmem, size = 0x1000, scoped, tag = 'output window, operand 0']
    #allocation4 [shape = 's32[2]{0}', space=sflag, size = 0x8, scoped, tag = 'scoped memory for tpu_custom_call.1']
    %10 = vsyncpa [#allocation4], 0
    %s11 = scalar_lea.sflag [#allocation4], 1
    %12 = vsyncpa %s11, 0
    loop: start=0, step=1, limit=4
    $region2: #{tpu_custom_call.1} parent=1 // loop_pre_header
      _
    $region3: #{tpu_custom_call.1} parent=1 // loop_header
      %s14 = sphi 0, %s18
      %p15 = scmp.ge.s32.totalorder %s14, 4
      %s21 = sphi 0, %s33
      %s22 = sphi 0, %s29
      %s23 = sphi 0, %s21
      %s24 = sphi 0, %s22
      %s25 = sphi 0, %s23
      %s26 = sphi 0, %s24
      %s38 = sphi 0, %s40
      %s41 = sphi 0, %s38
      %s42 = sphi 0, %s41
      %s58 = sphi 0, %s42
      %s62 = sphi 0, %s62
      %s64 = sphi 0, %s62
      %s65 = sphi 0, %s64
      %s79 = sphi 0, %s65
      %s83 = sphi 0, %s83
      %s85 = sphi 0, %s83
      %s86 = sphi 0, %s85
      %s100 = sphi 0, %s86
      %s108 = sphi 0, %s110
      %s111 = sphi 0, %s108
      %s112 = sphi 0, %s111
      %s128 = sphi 0, %s112
      %s136 = sphi 0, %s138
      %s139 = sphi 0, %s136
      %s140 = sphi 0, %s139
      %s156 = sphi 0, %s140
      %s164 = sphi 0, %s166
      %s167 = sphi 0, %s164
      %s168 = sphi 0, %s167
      %s184 = sphi 0, %s168
    $region4: #{tpu_custom_call.1} parent=1 // loop_header_branch
      %17 = sbr.rel (%p15) target = $region8
    $region5: #{tpu_custom_call.1} parent=1 // loop_body
      %s19 = ssub.s32 %s14, 1
      %s20 = ssub.s32 %s14, 2
      %s27 = sadd.s32 1, %s22
      %p28 = scmp.ge.s32.totalorder %s27, 1
      %s29 = scalar_select %p28, 0, %s27
      %s30 = sadd.s32 1, %s21
      %s31 = scalar_select %p28, %s30, %s21
      %p32 = scmp.ge.s32.totalorder %s31, 2
      %s33 = scalar_select %p32, 0, %s31
      %s34 = ssub.s32 %s21, %s33
      %s35 = ssub.s32 %s22, %s29
      %s36 = sor.u32 %s34, %s35
      %p37 = scmp.eq.s32.totalorder %s36, 0
      %s39 = sadd.s32 %s38, 1
      %s40 = scalar_select %p37, %s38, %s39
      %p43 = pneg %p37
      %p44 = scmp.eq.s32.totalorder %s14, 1
      %p45 = por %p43, %p44
      %p46 = scmp.ne.s32.totalorder %s38, %s41
      %p47 = scmp.eq.s32.totalorder %s14, 0
      %p48 = por %p46, %p47
      %p49 = scmp.ne.s32.totalorder %s38, %s41
      %p50 = scmp.eq.s32.totalorder %s19, 1
      %p51 = por %p49, %p50
      %p52 = scmp.ne.s32.totalorder %s41, %s42
      %p53 = scmp.eq.s32.totalorder %s19, 0
      %p54 = por %p52, %p53
      %p55 = scmp.ne.s32.totalorder %s41, %s42
      %p56 = scmp.eq.s32.totalorder %s20, 1
      %p57 = por %p55, %p56
      %p59 = scmp.ne.s32.totalorder %s42, %s58
      %p60 = scmp.eq.s32.totalorder %s20, 0
      %p61 = por %p59, %p60
      %s63 = sadd.s32 %s62, 1
      %p66 = scmp.eq.s32.totalorder %s14, 1
      %p67 = scmp.ne.s32.totalorder %s62, %s64
      %p68 = scmp.eq.s32.totalorder %s14, 0
      %p69 = por %p67, %p68
      %p70 = scmp.ne.s32.totalorder %s62, %s64
      %p71 = scmp.eq.s32.totalorder %s19, 1
      %p72 = por %p70, %p71
      %p73 = scmp.ne.s32.totalorder %s64, %s65
      %p74 = scmp.eq.s32.totalorder %s19, 0
      %p75 = por %p73, %p74
      %p76 = scmp.ne.s32.totalorder %s64, %s65
      %p77 = scmp.eq.s32.totalorder %s20, 1
      %p78 = por %p76, %p77
      %p80 = scmp.ne.s32.totalorder %s65, %s79
      %p81 = scmp.eq.s32.totalorder %s20, 0
      %p82 = por %p80, %p81
      %s84 = sadd.s32 %s83, 1
      %p87 = scmp.eq.s32.totalorder %s14, 1
      %p88 = scmp.ne.s32.totalorder %s83, %s85
      %p89 = scmp.eq.s32.totalorder %s14, 0
      %p90 = por %p88, %p89
      %p91 = scmp.ne.s32.totalorder %s83, %s85
      %p92 = scmp.eq.s32.totalorder %s19, 1
      %p93 = por %p91, %p92
      %p94 = scmp.ne.s32.totalorder %s85, %s86
      %p95 = scmp.eq.s32.totalorder %s19, 0
      %p96 = por %p94, %p95
      %p97 = scmp.ne.s32.totalorder %s85, %s86
      %p98 = scmp.eq.s32.totalorder %s20, 1
      %p99 = por %p97, %p98
      %p101 = scmp.ne.s32.totalorder %s86, %s100
      %p102 = scmp.eq.s32.totalorder %s20, 0
      %p103 = por %p101, %p102
      %s104 = ssub.s32 %s22, %s29
      %s105 = ssub.s32 %s21, %s33
      %s106 = sor.u32 %s104, %s105
      %p107 = scmp.eq.s32.totalorder %s106, 0
      %s109 = sadd.s32 %s108, 1
      %s110 = scalar_select %p107, %s108, %s109
      %p113 = pneg %p107
      %p114 = scmp.eq.s32.totalorder %s14, 1
      %p115 = por %p113, %p114
      %p116 = scmp.ne.s32.totalorder %s108, %s111
      %p117 = scmp.eq.s32.totalorder %s14, 0
      %p118 = por %p116, %p117
      %p119 = scmp.ne.s32.totalorder %s108, %s111
      %p120 = scmp.eq.s32.totalorder %s19, 1
      %p121 = por %p119, %p120
      %p122 = scmp.ne.s32.totalorder %s111, %s112
      %p123 = scmp.eq.s32.totalorder %s19, 0
      %p124 = por %p122, %p123
      %p125 = scmp.ne.s32.totalorder %s111, %s112
      %p126 = scmp.eq.s32.totalorder %s20, 1
      %p127 = por %p125, %p126
      %p129 = scmp.ne.s32.totalorder %s112, %s128
      %p130 = scmp.eq.s32.totalorder %s20, 0
      %p131 = por %p129, %p130
      %s132 = ssub.s32 %s22, %s29
      %s133 = ssub.s32 %s21, %s33
      %s134 = sor.u32 %s132, %s133
      %p135 = scmp.eq.s32.totalorder %s134, 0
      %s137 = sadd.s32 %s136, 1
      %s138 = scalar_select %p135, %s136, %s137
      %p141 = pneg %p135
      %p142 = scmp.eq.s32.totalorder %s14, 1
      %p143 = por %p141, %p142
      %p144 = scmp.ne.s32.totalorder %s136, %s139
      %p145 = scmp.eq.s32.totalorder %s14, 0
      %p146 = por %p144, %p145
      %p147 = scmp.ne.s32.totalorder %s136, %s139
      %p148 = scmp.eq.s32.totalorder %s19, 1
      %p149 = por %p147, %p148
      %p150 = scmp.ne.s32.totalorder %s139, %s140
      %p151 = scmp.eq.s32.totalorder %s19, 0
      %p152 = por %p150, %p151
      %p153 = scmp.ne.s32.totalorder %s139, %s140
      %p154 = scmp.eq.s32.totalorder %s20, 1
      %p155 = por %p153, %p154
      %p157 = scmp.ne.s32.totalorder %s140, %s156
      %p158 = scmp.eq.s32.totalorder %s20, 0
      %p159 = por %p157, %p158
      %s160 = ssub.s32 %s21, %s33
      %s161 = ssub.s32 %s22, %s29
      %s162 = sor.u32 %s160, %s161
      %p163 = scmp.eq.s32.totalorder %s162, 0
      %s165 = sadd.s32 %s164, 1
      %s166 = scalar_select %p163, %s164, %s165
      %p169 = pneg %p163
      %p170 = scmp.eq.s32.totalorder %s14, 1
      %p171 = por %p169, %p170
      %p172 = scmp.ne.s32.totalorder %s164, %s167
      %p173 = scmp.eq.s32.totalorder %s14, 0
      %p174 = por %p172, %p173
      %p175 = scmp.ne.s32.totalorder %s164, %s167
      %p176 = scmp.eq.s32.totalorder %s19, 1
      %p177 = por %p175, %p176
      %p178 = scmp.ne.s32.totalorder %s167, %s168
      %p179 = scmp.eq.s32.totalorder %s19, 0
      %p180 = por %p178, %p179
      %p181 = scmp.ne.s32.totalorder %s167, %s168
      %p182 = scmp.eq.s32.totalorder %s20, 1
      %p183 = por %p181, %p182
      %p185 = scmp.ne.s32.totalorder %s168, %s184
      %p186 = scmp.eq.s32.totalorder %s20, 0
      %p187 = por %p185, %p186
      %p188 = scmp.le.s32.totalorder 1, %s14
      %p189 = scmp.lt.s32.totalorder %s14, 3
      %p190 = pnand %p188, %p189
      %p191 = pneg %p190
      // Predicated region
      $region9: #{tpu_custom_call.1} parent=5 // pred_check
        _
      $region10: #{tpu_custom_call.1} parent=5 // pred_check_branch
        %193 = sbr.rel (%p190) target = $region12
      $region11: #{tpu_custom_call.1} parent=5 // pred_region
        %s194 = ssub.s32 %s14, 1
        // Predicated region
        $region13: #{tpu_custom_call.1} parent=11 // pred_check
          %p195 = pneg %p75
        $region14: #{tpu_custom_call.1} parent=11 // pred_check_branch
          %197 = sbr.rel (%p195) target = $region16
        $region15: #{tpu_custom_call.1} parent=11 // pred_region
          _
        $region16: #{tpu_custom_call.1} parent=11 // pred_fallthru
          _
        // Predicated region
        $region17: #{tpu_custom_call.1} parent=11 // pred_check
          %p198 = pneg %p96
        $region18: #{tpu_custom_call.1} parent=11 // pred_check_branch
          %200 = sbr.rel (%p198) target = $region20
        $region19: #{tpu_custom_call.1} parent=11 // pred_region
          _
        $region20: #{tpu_custom_call.1} parent=11 // pred_fallthru
          _
      $region12: #{tpu_custom_call.1} parent=5 // pred_fallthru
        _
      %p201 = scmp.lt.s32.totalorder %s14, 2
      // Predicated region
      $region21: #{tpu_custom_call.1} parent=5 // pred_check
        %p202 = pneg %p201
      $region22: #{tpu_custom_call.1} parent=5 // pred_check_branch
        %204 = sbr.rel (%p202) target = $region24
      $region23: #{tpu_custom_call.1} parent=5 // pred_region
        // Predicated region
        $region25: #{tpu_custom_call.1} parent=23 // pred_check
          %p205 = pneg %p48
        $region26: #{tpu_custom_call.1} parent=23 // pred_check_branch
          %207 = sbr.rel (%p205) target = $region28
        $region27: #{tpu_custom_call.1} parent=23 // pred_region
          %p208 = scmp.lt.s32.totalorder %s21, 1
          %s209 = scalar_select %p208, %s21, 1
          %p210 = scmp.lt.s32.totalorder %s22, 0
          %s211 = scalar_select %p210, %s22, 0
          %s212 = sadd.s32 %s211, %s209
          %s213 = smul.addr %s212, 4
          %s214 = scalar_lea.vmem %s0, %s213
        $region28: #{tpu_custom_call.1} parent=23 // pred_fallthru
          _
        // Predicated region
        $region29: #{tpu_custom_call.1} parent=23 // pred_check
          %p215 = pneg %p118
        $region30: #{tpu_custom_call.1} parent=23 // pred_check_branch
          %217 = sbr.rel (%p215) target = $region32
        $region31: #{tpu_custom_call.1} parent=23 // pred_region
          %p218 = scmp.lt.s32.totalorder %s22, 0
          %s219 = scalar_select %p218, %s22, 0
          %p220 = scmp.lt.s32.totalorder %s21, 1
          %s221 = scalar_select %p220, %s21, 1
          %s222 = smul.addr %s219, 2
          %s223 = sadd.s32 %s221, %s222
          %s224 = smul.addr %s223, 4
          %s225 = scalar_lea.vmem %s3, %s224
        $region32: #{tpu_custom_call.1} parent=23 // pred_fallthru
          _
        // Predicated region
        $region33: #{tpu_custom_call.1} parent=23 // pred_check
          %p226 = pneg %p146
        $region34: #{tpu_custom_call.1} parent=23 // pred_check_branch
          %228 = sbr.rel (%p226) target = $region36
        $region35: #{tpu_custom_call.1} parent=23 // pred_region
          %p229 = scmp.lt.s32.totalorder %s22, 0
          %s230 = scalar_select %p229, %s22, 0
          %p231 = scmp.lt.s32.totalorder %s21, 1
          %s232 = scalar_select %p231, %s21, 1
          %s233 = smul.addr %s230, 2
          %s234 = sadd.s32 %s232, %s233
          %s235 = smul.addr %s234, 4
          %s236 = scalar_lea.vmem %s4, %s235
        $region36: #{tpu_custom_call.1} parent=23 // pred_fallthru
          _
      $region24: #{tpu_custom_call.1} parent=5 // pred_fallthru
        _
      %p237 = scmp.le.s32.totalorder 1, %s14
      %p238 = scmp.lt.s32.totalorder %s14, 3
      %p239 = pnand %p237, %p238
      %p240 = pneg %p239
      // Predicated region
      $region37: #{tpu_custom_call.1} parent=5 // pred_check
        _
      $region38: #{tpu_custom_call.1} parent=5 // pred_check_branch
        %242 = sbr.rel (%p239) target = $region40
      $region39: #{tpu_custom_call.1} parent=5 // pred_region
        %s243 = ssub.s32 %s14, 1
        %p244 = scmp.lt.s32.totalorder %s23, 1
        %s245 = scalar_select %p244, %s23, 1
        %p246 = scmp.lt.s32.totalorder %s24, 0
        %s247 = scalar_select %p246, %s24, 0
        %s248 = sadd.s32 %s247, %s245
        %s249 = smul.addr %s248, 4
        %s250 = scalar_lea.vmem %s0, %s249
        %p251 = pneg %p54
        %p252 = pneg %p51
        %p253 = pneg %p75
        %p254 = pneg %p72
        %p255 = pneg %p96
        %p256 = pneg %p93
        %p257 = scmp.lt.s32.totalorder %s24, 0
        %s258 = scalar_select %p257, %s24, 0
        %p259 = scmp.lt.s32.totalorder %s23, 1
        %s260 = scalar_select %p259, %s23, 1
        %s261 = smul.addr %s258, 2
        %s262 = sadd.s32 %s260, %s261
        %s263 = smul.addr %s262, 4
        %s264 = scalar_lea.vmem %s3, %s263
        %p265 = pneg %p124
        %p266 = pneg %p121
        %p267 = scmp.lt.s32.totalorder %s24, 0
        %s268 = scalar_select %p267, %s24, 0
        %p269 = scmp.lt.s32.totalorder %s23, 1
        %s270 = scalar_select %p269, %s23, 1
        %s271 = smul.addr %s268, 2
        %s272 = sadd.s32 %s270, %s271
        %s273 = smul.addr %s272, 4
        %s274 = scalar_lea.vmem %s4, %s273
        %p275 = pneg %p152
        %p276 = pneg %p149
        %p277 = pneg %p180
        %p278 = pneg %p177
        %s279 = sand.u32 %s167, 1
        %s280 = scalar_lea.sflag [#allocation4], %s279
        %s281 = sand.u32 %s167, 1
        %s282 = smul.addr %s281, 4
        %s283 = scalar_lea.vmem [#allocation3], %s282
        %p284 = scmp.lt.s32.totalorder %s23, 1
        %s285 = scalar_select %p284, %s23, 1
        %p286 = scmp.lt.s32.totalorder %s24, 0
        %s287 = scalar_select %p286, %s24, 0
        %s288 = sadd.s32 %s287, %s285
        %s289 = smul.addr %s288, 4
        %s290 = scalar_lea.vmem %s0, %s289
        %p291 = scmp.lt.s32.totalorder %s24, 0
        %s292 = scalar_select %p291, %s24, 0
        %p293 = scmp.lt.s32.totalorder %s23, 1
        %s294 = scalar_select %p293, %s23, 1
        %s295 = smul.addr %s292, 2
        %s296 = sadd.s32 %s294, %s295
        %s297 = smul.addr %s296, 4
        %s298 = scalar_lea.vmem %s3, %s297
        %p299 = scmp.lt.s32.totalorder %s24, 0
        %s300 = scalar_select %p299, %s24, 0
        %p301 = scmp.lt.s32.totalorder %s23, 1
        %s302 = scalar_select %p301, %s23, 1
        %s303 = smul.addr %s300, 2
        %s304 = sadd.s32 %s302, %s303
        %s305 = smul.addr %s304, 4
        %s306 = scalar_lea.vmem %s4, %s305
        %v308 = vld [vmem:[%s290] sm:$0xf]
        %v309 = vpack.c.bf16 %v308, %v308
        %v311 = vunpack.c.l.b16 %v309
        %v312 = vpack.c.b16 %v311, %v311
        %v313 = vrot.slane %v312, 6
        %vm315 = vcmask 125954
        %316 = vst.msk [vmem:[#allocation2] sm:$0xc] %vm315, %v313
        %v317 = vld [vmem:[%s298] sm:$0xf]
        %v318 = vpack.c.bf16 %v317, %v317
        %v319 = vld [vmem:[%s306] sm:$0xf]
        %v320 = vpack.c.bf16 %v319, %v319
        %321 = vrot.lane.b32.xlu0 %v309, 1
        %v322 = vpop.permute.xlu0 %321
        %vm323 = vcmask 7168
        %v326 = vsel %vm323, %v318, %v322
        %vm328 = vcmask 123904
        %329 = vst.msk [vmem:[#allocation2] sm:$0x3] %vm328, %v326
        %330 = vrot.lane.b32.xlu0 %v309, 127
        %v331 = vpop.permute.xlu0 %330
        %333 = vrot.lane.b32.xlu0 %v320, 15
        %v334 = vpop.permute.xlu0 %333
        %vm335 = vcmask 121856
        %v338 = vsel %vm335, %v331, %v334
        %340 = vst.msk [vmem:[#allocation2 + $0x4] sm:$0x3] %vm328, %v338
        %v341 = vld [vmem:[%s1] sm:$0xf]
        %v342 = vld [vmem:[#allocation2] sm:$0xf]
        %v343 = vld [vmem:[#allocation2 + $0x4] sm:$0x3]
        %v344 = vld [vmem:[%s2] sm:$0xff]
        %346 = vset.pattern.permute.xlu0 0
        %347 = vperm.xlu0 %346, %v344
        %v348 = vpop.permute.xlu0 %347
        %v352 = vunpack.c.l.b16 %v342
        %v353 = vunpack.c.l.b16 %v343
        %v354 = vpack.c.b16 %v353, %v352
        %vm355 = vcmask 97280
        %v357 = vsel %vm355, %v341, 0
        %vm359 = vcmask 1045504
        %v361 = vsel %vm359, %v354, 0
        %363 = vmatprep.subr.bf16.mxu0 0
        %364 = vmatpush1.bf16.msra.mxu0 %v361
        %365 = vmatprep.subr.bf16.mxu0 0
        %366 = vmatpush1.bf16.msra.mxu0 0
        %367 = vmatprep.subr.bf16.mxu0 0
        %368 = vmatpush1.bf16.msra.mxu0 0
        %369 = vmatprep.subr.bf16.mxu0 0
        %370 = vmatpush1.bf16.msra.mxu0 0
        %371 = vmatprep.subr.bf16.mxu0 0
        %372 = vmatpush1.bf16.msra.mxu0 0
        %373 = vmatprep.subr.bf16.mxu0 0
        %374 = vmatpush1.bf16.msra.mxu0 0
        %375 = vmatprep.subr.bf16.mxu0 0
        %376 = vmatpush1.bf16.msra.mxu0 0
        %377 = vmatprep.subr.bf16.mxu0 0
        %378 = vmatpush1.bf16.msra.mxu0 0
        %379 = vmatprep.subr.bf16.mxu0 0
        %380 = vmatpush1.bf16.msra.mxu0 0
        %381 = vmatprep.subr.bf16.mxu0 0
        %382 = vmatpush1.bf16.msra.mxu0 0
        %383 = vmatprep.subr.bf16.mxu0 0
        %384 = vmatpush1.bf16.msra.mxu0 0
        %385 = vmatprep.subr.bf16.mxu0 0
        %386 = vmatpush1.bf16.msra.mxu0 0
        %387 = vmatprep.subr.bf16.mxu0 0
        %388 = vmatpush1.bf16.msra.mxu0 0
        %389 = vmatprep.subr.bf16.mxu0 0
        %390 = vmatpush1.bf16.msra.mxu0 0
        %391 = vmatprep.subr.bf16.mxu0 0
        %392 = vmatpush1.bf16.msra.mxu0 0
        %393 = vmatprep.subr.bf16.mxu0 0
        %394 = vmatpush1.bf16.msra.mxu0 0
        %395 = vmatprep.mubr.bf16.mxu0 0
        %396 = vmatmul.mubr.bf16.gmra.mrb[0].mxu0 %v357
        %v397 = vpop.f32.mrb[0].mxu0
        %v398 = vadd.f32 %v348, %v397
        %v399 = vpop.f32.mrb[0].mxu0
        %v400 = vpop.f32.mrb[0].mxu0
        %v401 = vpop.f32.mrb[0].mxu0
        %402 = vdwg.mxu0
        %v403 = vxor.u32 %v398, 2147483648
        %v404 = vmul.f32 %v403, 1.442695
        %v405 = vpow.pop %v404
        %v406 = vadd.f32 %v405, 1.0
        %v407 = vrcp.pop %v406
        %v408 = vmul.f32 1.0, %v407
        %v410 = vrot.slane %v408, 4
        %v412 = vmul.f32 %v398, %v410
        %v413 = vadd.f32 %v308, %v412
        %vm414 = vcmask 125952
        %415 = vst.msk [vmem:[%s283] sm:$0xf] %vm414, %v413
        %s416 = sand.u32 %s167, 1
        %s417 = scalar_lea.sflag [#allocation4], %s416
        %s418 = sand.u32 %s167, 1
        %s419 = smul.addr %s418, 4
        %s420 = scalar_lea.vmem [#allocation3], %s419
        // Predicated region
        $region41: #{tpu_custom_call.1} parent=39 // pred_check
          %p421 = pneg %p177
        $region42: #{tpu_custom_call.1} parent=39 // pred_check_branch
          %423 = sbr.rel (%p421) target = $region44
        $region43: #{tpu_custom_call.1} parent=39 // pred_region
          %s425 = ssub.s32 64, 64
          %426 = vsyncadd %s417, %s425
          %s427 = sadd.s32 %s24, %s23
          %s428 = smul.addr %s427, 64
          %s429 = scalar_lea.hbm %s5, %s428
          %s431 = sshll.u32 %s420, 4
          %s432 = int_to_ptr.vmem [resolvable:$true] %s431
          %434 = dma.vmem_to_hbm [thread:$0]  %s432, 64, %s429, %s417
        $region44: #{tpu_custom_call.1} parent=39 // pred_fallthru
          _
      $region40: #{tpu_custom_call.1} parent=5 // pred_fallthru
        _
      %p435 = scmp.le.s32.totalorder 2, %s14
      // Predicated region
      $region45: #{tpu_custom_call.1} parent=5 // pred_check
        %p436 = pneg %p435
      $region46: #{tpu_custom_call.1} parent=5 // pred_check_branch
        %438 = sbr.rel (%p436) target = $region48
      $region47: #{tpu_custom_call.1} parent=5 // pred_region
        %s439 = ssub.s32 %s14, 2
        // Predicated region
        $region49: #{tpu_custom_call.1} parent=47 // pred_check
          %p440 = pneg %p183
        $region50: #{tpu_custom_call.1} parent=47 // pred_check_branch
          %442 = sbr.rel (%p440) target = $region52
        $region51: #{tpu_custom_call.1} parent=47 // pred_region
          %s443 = sand.u32 %s168, 1
          %s444 = scalar_lea.sflag [#allocation4], %s443
          %s445 = sand.u32 %s168, 1
          %s446 = smul.addr %s445, 4
          %s447 = scalar_lea.vmem [#allocation3], %s446
          %448 = dma.done %s444, 64
        $region52: #{tpu_custom_call.1} parent=47 // pred_fallthru
          _
      $region48: #{tpu_custom_call.1} parent=5 // pred_fallthru
        _
    $region6: #{tpu_custom_call.1} parent=1 // loop_footer
      %s18 = sadd.s32 1, %s14
    $region7: #{tpu_custom_call.1} parent=1 // loop_footer_branch
      %13 = sbr.rel target = $region3
    $region8: #{tpu_custom_call.1} parent=1 // loop_exit
      _
    %449 = vsyncpa [#allocation4], 1
    %s450 = scalar_lea.sflag [#allocation4], 1
    %451 = vsyncpa %s450, 1

</llo_original>
